<compile_context>
chip_gen: v7x
topology: tpu7x:2x2x1
jax: 0.10.0
libtpu: 0.0.40
codegen_flags: <defaults>
</compile_context>

<pallas_src>
import math
import functools

import jax
import jax.numpy as jnp
from jax import lax
from jax.experimental import pallas as pl
from jax.experimental.pallas import tpu as pltpu


_VMEM_LIMIT = 64 * 1024 * 1024   # <= physical VMEM on v5e/v6e/v7x


def _round_up(x, m):
    return (x + m - 1) // m * m


# -----------------------------------------------------------------------------
# Kernel 1: tiled dense projection  y = x @ W_t + b     (W_t is (E_in, E_out))
# -----------------------------------------------------------------------------
def _linear_kernel(x_ref, w_ref, b_ref, o_ref, acc_ref):
    @pl.when(pl.program_id(2) == 0)
    def _init():
        acc_ref[...] = jnp.zeros_like(acc_ref)

    acc_ref[...] += jnp.dot(x_ref[...], w_ref[...],
                            preferred_element_type=jnp.float32)

    @pl.when(pl.program_id(2) == pl.num_programs(2) - 1)
    def _finalize():
        o_ref[...] = (acc_ref[...] + b_ref[...].astype(jnp.float32)).astype(o_ref.dtype)


def pallas_linear(x, w_t, b, *, tm=512, tn=256, tk=512):
    """x: (M, E_in), w_t: (E_in, E_out), b: (E_out,) -> (M, E_out)."""
    M, K = x.shape
    N = w_t.shape[1]

    tm = min(tm, _round_up(M, 8))
    tn = min(tn, _round_up(N, 128))
    tk = min(tk, _round_up(K, 128))
    Mp, Kp, Np = _round_up(M, tm), _round_up(K, tk), _round_up(N, tn)

    xp = x if (Mp == M and Kp == K) else jnp.pad(x, ((0, Mp - M), (0, Kp - K)))
    wp = w_t if (Kp == K and Np == N) else jnp.pad(w_t, ((0, Kp - K), (0, Np - N)))
    bp = (b if Np == N else jnp.pad(b, (0, Np - N))).reshape(1, Np)

    out = pl.pallas_call(
        _linear_kernel,
        out_shape=jax.ShapeDtypeStruct((Mp, Np), x.dtype),
        grid=(Mp // tm, Np // tn, Kp // tk),
        in_specs=[
            pl.BlockSpec((tm, tk), lambda i, j, k: (i, k)),
            pl.BlockSpec((tk, tn), lambda i, j, k: (k, j)),
            pl.BlockSpec((1, tn), lambda i, j, k: (0, j)),
        ],
        out_specs=pl.BlockSpec((tm, tn), lambda i, j, k: (i, j)),
        scratch_shapes=[pltpu.VMEM((tm, tn), jnp.float32)],
        compiler_params=pltpu.CompilerParams(
            dimension_semantics=("parallel", "parallel", "arbitrary"),
            vmem_limit_bytes=_VMEM_LIMIT),
    )(xp, wp, bp)

    if Mp != M or Np != N:
        out = out[:M, :N]
    return out


# -----------------------------------------------------------------------------
# Kernel 2: multi-head scaled-dot-product attention (lane-dense).
#   One grid step = one batch element, one block of queries, ALL heads.
#   q block: (tl, E)   k/v blocks: (S, E)   (E = H*D on the lane axis)
#   masks:   key-padding (1, S) int8, attn_mask (tl, S) / (H, tl, S) int8 or f32
#   outputs: attention block (tl, E) written as ONE lane-dense store,
#            optional head-averaged weights block (tl, S).
# -----------------------------------------------------------------------------
def _mha_attention_kernel(*refs, num_heads, head_dim, has_kpm, has_am,
                          am_additive, am_3d, need_weights):
    it = iter(refs)
    q_ref = next(it)                                   # (tl, E)
    k_ref = next(it)                                   # (S, E)
    v_ref = next(it)                                   # (S, E)
    kpm_ref = next(it) if has_kpm else None            # (1, S) int8
    am_ref = next(it) if has_am else None              # (tl, S) or (H, tl, S)
    o_ref = next(it)                                   # (tl, E)
    w_ref = next(it) if need_weights else None         # (tl, S)

    q = q_ref[...]
    k = k_ref[...]
    v = v_ref[...]

    neg_inf = jnp.float32(-jnp.inf)
    kpm_bad = (kpm_ref[...] != 0) if has_kpm else None          # (1, S) bool
    am2 = am_ref[...] if (has_am and not am_3d) else None       # (tl, S)

    H, D = num_heads, head_dim
    o_heads = []
    w_sum = None
    for h in range(H):                     # static loop; each head is a plain 2-D MXU dot
        lo = h * D
        q_h = q[:, lo:lo + D]                                   # contiguous lane slice
        k_h = k[:, lo:lo + D]
        s = lax.dot_general(q_h, k_h, (((1,), (1,)), ((), ())),
                            preferred_element_type=jnp.float32)  # (tl, S)
        if has_am:
            am_h = am2 if am2 is not None else am_ref[h]
            if am_additive:
                s = s + am_h.astype(jnp.float32)
            else:
                s = jnp.where(am_h != 0, neg_inf, s)
        if has_kpm:
            s = jnp.where(kpm_bad, neg_inf, s)
        m = jnp.max(s, axis=-1, keepdims=True)
        p = jnp.exp(s - m)
        denom = jnp.sum(p, axis=-1, keepdims=True)
        p = p * (1.0 / denom)                    # exact reciprocal: only (tl, 1)
        o_h = lax.dot_general(p.astype(v.dtype), v[:, lo:lo + D],
                              (((1,), (0,)), ((), ())),
                              preferred_element_type=jnp.float32)  # (tl, D)
        o_heads.append(o_h)
        if need_weights:
            w_sum = p if w_sum is None else w_sum + p

    # single lane-dense (tl, E) store
    o_ref[...] = jnp.concatenate(o_heads, axis=-1).astype(o_ref.dtype)
    if need_weights:
        w_ref[...] = (w_sum * (1.0 / H)).astype(w_ref.dtype)


def pallas_attention(q, k, v, kpm_i8, attn_mask, am_additive, need_weights,
                     num_heads, *, tl_target=256):
    """q: (N, L, E); k/v: (N, S, E); kpm_i8: (N, 1, S) int8 or None;
    attn_mask: (L, S) or (N, H, L, S), int8 (nonzero = masked) or float (additive)."""
    N, L, E = q.shape
    S = k.shape[1]
    H = num_heads
    D = E // H

    # fixed tile of queries, padded (multiple of 8 sublanes) -- no divisor search
    tl = tl_target if L >= tl_target else _round_up(L, 8)
    Lp = _round_up(L, tl)
    if Lp != L:
        q = jnp.pad(q, ((0, 0), (0, Lp - L), (0, 0)))
        if attn_mask is not None:
            pad = [(0, 0)] * attn_mask.ndim
            pad[-2] = (0, Lp - L)
            attn_mask = jnp.pad(attn_mask, pad)

    grid = (N, Lp // tl)

    inputs = [q, k, v]
    in_specs = [
        pl.BlockSpec((None, tl, E), lambda n, l: (n, l, 0)),
        # K/V block index constant across the innermost l axis -> DMA'd once per n
        pl.BlockSpec((None, S, E), lambda n, l: (n, 0, 0)),
        pl.BlockSpec((None, S, E), lambda n, l: (n, 0, 0)),
    ]
    has_kpm = kpm_i8 is not None
    if has_kpm:
        inputs.append(kpm_i8)
        in_specs.append(pl.BlockSpec((None, 1, S), lambda n, l: (n, 0, 0)))
    has_am = attn_mask is not None
    am_3d = bool(has_am and attn_mask.ndim == 4)
    if has_am:
        inputs.append(attn_mask)
        if am_3d:
            in_specs.append(pl.BlockSpec((None, H, tl, S), lambda n, l: (n, 0, l, 0)))
        else:
            in_specs.append(pl.BlockSpec((tl, S), lambda n, l: (l, 0)))

    out_dtype = q.dtype
    out_shape = [jax.ShapeDtypeStruct((N, Lp, E), out_dtype)]
    out_specs = [pl.BlockSpec((None, tl, E), lambda n, l: (n, l, 0))]
    if need_weights:
        out_shape.append(jax.ShapeDtypeStruct((N, Lp, S), out_dtype))
        out_specs.append(pl.BlockSpec((None, tl, S), lambda n, l: (n, l, 0)))

    kernel = functools.partial(
        _mha_attention_kernel, num_heads=H, head_dim=D, has_kpm=has_kpm,
        has_am=has_am, am_additive=am_additive, am_3d=am_3d,
        need_weights=need_weights)

    outs = pl.pallas_call(
        kernel,
        out_shape=tuple(out_shape) if need_weights else out_shape[0],
        grid=grid,
        in_specs=in_specs,
        out_specs=tuple(out_specs) if need_weights else out_specs[0],
        compiler_params=pltpu.CompilerParams(
            dimension_semantics=("parallel", "parallel"),
            vmem_limit_bytes=_VMEM_LIMIT),
    )(*inputs)

    if need_weights:
        attn, w = outs
        if Lp != L:
            attn, w = attn[:, :L, :], w[:, :L, :]
        return attn, w
    attn = outs
    if Lp != L:
        attn = attn[:, :L, :]
    return attn, None


# -----------------------------------------------------------------------------
# Full forward (glue in JAX, compute in Pallas)
# -----------------------------------------------------------------------------
def multihead_attention_forward(
    query, key, value,                      # (L, N, E), (S, N, E), (S, N, E)
    in_proj_weight, in_proj_bias,           # (3E, E), (3E,)
    out_proj_weight, out_proj_bias,         # (E, E),  (E,)
    num_heads,
    key_padding_mask=None,                  # (N, S): True / nonzero = ignore key
    attn_mask=None,                         # (L, S) or (N*H, L, S); bool/byte/float
    need_weights=True,
):
    L, N, E = query.shape
    S = key.shape[0]
    H = num_heads
    assert E % H == 0
    D = E // H
    scale = 1.0 / math.sqrt(D)

    # seq-major -> batch-major (one XLA transpose per distinct input); all Pallas
    # blocks downstream stay lane-dense with E on the last axis.
    q_bf = jnp.transpose(query, (1, 0, 2))                     # (N, L, E)
    k_bf = q_bf if key is query else jnp.transpose(key, (1, 0, 2))
    if value is query:
        v_bf = q_bf
    elif value is key:
        v_bf = k_bf
    else:
        v_bf = jnp.transpose(value, (1, 0, 2))

    # fold 1/sqrt(D) into the Q projection (absorbed into the matmul)
    w_q = (in_proj_weight[:E] * scale).T
    b_q = in_proj_bias[:E] * scale
    w_k = in_proj_weight[E:2 * E].T
    b_k = in_proj_bias[E:2 * E]
    w_v = in_proj_weight[2 * E:].T
    b_v = in_proj_bias[2 * E:]

    if (key is query) and (value is query):      # self-attention: fused QKV projection
        qkv = pallas_linear(q_bf.reshape(N * L, E),
                            jnp.concatenate([w_q, w_k, w_v], axis=1),
                            jnp.concatenate([b_q, b_k, b_v]))
        q, k, v = qkv[:, :E], qkv[:, E:2 * E], qkv[:, 2 * E:]
    else:
        q = pallas_linear(q_bf.reshape(N * L, E), w_q, b_q)
        if value is key:                         # fused KV projection
            kv = pallas_linear(k_bf.reshape(N * S, E),
                               jnp.concatenate([w_k, w_v], axis=1),
                               jnp.concatenate([b_k, b_v]))
            k, v = kv[:, :E], kv[:, E:]
        else:
            k = pallas_linear(k_bf.reshape(N * S, E), w_k, b_k)
            v = pallas_linear(v_bf.reshape(N * S, E), w_v, b_v)

    q3 = q.reshape(N, L, E)
    k3 = k.reshape(N, S, E)
    v3 = v.reshape(N, S, E)

    # compact masks: int8 for bool/byte, float stays additive
    kpm_i8 = None
    if key_padding_mask is not None:
        kpm_i8 = key_padding_mask.astype(jnp.bool_).astype(jnp.int8).reshape(N, 1, S)

    am = None
    am_additive = False
    if attn_mask is not None:
        am = attn_mask
        if am.ndim == 3:                          # (N*H, L, S) -> (N, H, L, S)
            am = am.reshape(N, H, L, S)
        if am.dtype == jnp.bool_ or jnp.issubdtype(am.dtype, jnp.integer):
            am = am.astype(jnp.int8)              # nonzero = masked (expanded in-kernel)
            am_additive = False
        else:
            am = am.astype(jnp.float32)           # additive float mask
            am_additive = True

    attn3, weights = pallas_attention(q3, k3, v3, kpm_i8, am, am_additive,
                                      need_weights, H)

    out = pallas_linear(attn3.reshape(N * L, E), out_proj_weight.T, out_proj_bias)
    out = jnp.transpose(out.reshape(N, L, E), (1, 0, 2))       # back to (L, N, E)
    if need_weights:
        return out, weights
    return out, None


# -----------------------------------------------------------------------------
# Pure-JAX reference for verification
# -----------------------------------------------------------------------------
def _reference(query, key, value, w_in, b_in, w_out, b_out, H, kpm=None, am=None):
    L, N, E = query.shape
    S = key.shape[0]
    D = E // H
    q = query.reshape(L * N, E) @ w_in[:E].T + b_in[:E]
    k = key.reshape(S * N, E) @ w_in[E:2 * E].T + b_in[E:2 * E]
    v = value.reshape(S * N, E) @ w_in[2 * E:].T + b_in[2 * E:]
    q = q.reshape(L, N * H, D).transpose(1, 0, 2) / math.sqrt(D)
    k = k.reshape(S, N * H, D).transpose(1, 0, 2)
    v = v.reshape(S, N * H, D).transpose(1, 0, 2)
    s = jnp.einsum("bld,bsd->bls", q, k)
    if am is not None:
        amf = am
        if amf.dtype == jnp.bool_:
            amf = jnp.where(amf, -jnp.inf, 0.0)
        amf = amf.astype(jnp.float32)
        if amf.ndim == 2:
            amf = amf[None]
        s = s + amf
    if kpm is not None:
        m = jnp.where(kpm, -jnp.inf, 0.0)[:, None, None, :]
        m = jnp.broadcast_to(m, (N, H, L, S)).reshape(N * H, L, S)
        s = s + m
    p = jax.nn.softmax(s, axis=-1)
    o = jnp.einsum("bls,bsd->bld", p, v)
    o = o.transpose(1, 0, 2).reshape(L * N, E) @ w_out.T + b_out
    return o.reshape(L, N, E), p.reshape(N, H, L, S).mean(axis=1)


if __name__ == "__main__":
    embed_dim, num_heads = 32, 4
    L, S, N = 8, 10, 2

    key0 = jax.random.PRNGKey(0)
    ks = jax.random.split(key0, 8)

    # deterministic synthetic parameters (ScaledLinear effective weights/biases)
    in_proj_weight = 0.1 * jax.random.normal(ks[0], (3 * embed_dim, embed_dim), jnp.float32)
    in_proj_bias = 0.1 * jax.random.normal(ks[1], (3 * embed_dim,), jnp.float32)
    out_proj_weight = 0.25 * 0.1 * jax.random.normal(ks[2], (embed_dim, embed_dim), jnp.float32)
    out_proj_bias = 0.1 * jax.random.normal(ks[3], (embed_dim,), jnp.float32)

    query = jax.random.normal(ks[4], (L, N, embed_dim), jnp.float32)
    key_ = jax.random.normal(ks[5], (S, N, embed_dim), jnp.float32)
    value = jax.random.normal(ks[6], (S, N, embed_dim), jnp.float32)

    # ---- Test 1: cross-attention, key_padding_mask, need_weights=True ----
    key_padding_mask = jnp.zeros((N, S), jnp.bool_).at[1, -2:].set(True)
    attn_out, attn_weights = multihead_attention_forward(
        query, key_, value,
        in_proj_weight, in_proj_bias,
        out_proj_weight, out_proj_bias,
        num_heads,
        key_padding_mask=key_padding_mask,
        attn_mask=None,
        need_weights=True,
    )
    attn_out = jax.block_until_ready(attn_out)
    attn_weights = jax.block_until_ready(attn_weights)

    ref_out, ref_w = _reference(query, key_, value, in_proj_weight, in_proj_bias,
                                out_proj_weight, out_proj_bias, num_heads,
                                kpm=key_padding_mask)

    assert attn_out.shape == (L, N, embed_dim)
    assert attn_weights.shape == (N, L, S)
    assert jnp.allclose(attn_out, ref_out, atol=1e-4, rtol=1e-4)
    assert jnp.allclose(attn_weights, ref_w, atol=1e-4, rtol=1e-4)

    # ---- Test 2: self-attention (fused QKV), 2-D bool attn_mask, need_weights=False ----
    attn_mask = jnp.arange(L)[None, :] > (jnp.arange(L)[:, None] + 4)   # (L, L), no fully-masked row
    out2, w2 = multihead_attention_forward(
        query, query, query,
        in_proj_weight, in_proj_bias,
        out_proj_weight, out_proj_bias,
        num_heads,
        key_padding_mask=None,
        attn_mask=attn_mask,
        need_weights=False,
    )
    out2 = jax.block_until_ready(out2)
    ref_out2, _ = _reference(query, query, query, in_proj_weight, in_proj_bias,
                             out_proj_weight, out_proj_bias, num_heads,
                             kpm=None, am=attn_mask)
    assert w2 is None
    assert out2.shape == (L, N, embed_dim)
    assert jnp.allclose(out2, ref_out2, atol=1e-4, rtol=1e-4)

    print("KERNEL_OK")
</pallas_src>

<mosaic_0001>
module attributes {stable_mosaic.version = 11 : i64} {
  func.func @_linear_kernel(%arg0: i32, %arg1: i32, %arg2: i32, %arg3: memref<16x128xf32, #tpu.memory_space<vmem>>, %arg4: memref<128x128xf32, #tpu.memory_space<vmem>>, %arg5: memref<1x128xf32, #tpu.memory_space<vmem>>, %arg6: memref<16x128xf32, #tpu.memory_space<vmem>>, %arg7: memref<16x128xf32, #tpu.memory_space<vmem>>) attributes {dimension_semantics = [#tpu.dimension_semantics<parallel>, #tpu.dimension_semantics<parallel>, #tpu.dimension_semantics<arbitrary>], iteration_bounds = array<i64: 1, 1, 1>, scalar_prefetch = 0 : i64, scratch_operands = 1 : i64, tpu.core_type = #tpu.core_type<tc>, window_params = [{transform_indices = @transform_0, window_bounds = array<i64: 16, 128>}, {transform_indices = @transform_1, window_bounds = array<i64: 128, 128>}, {transform_indices = @transform_2, window_bounds = array<i64: 1, 128>}, {transform_indices = @transform_3, window_bounds = array<i64: 16, 128>}]} {
    %c0_i32 = arith.constant 0 : i32
    %0 = arith.cmpi eq, %arg2, %c0_i32 : i32
    %1 = arith.extui %0 : i1 to i32
    %c0_i32_0 = arith.constant 0 : i32
    %2 = arith.cmpi ne, %1, %c0_i32_0 : i32
    scf.if %2 {
      %cst_10 = arith.constant 0.000000e+00 : f32
      %12 = vector.broadcast %cst_10 : f32 to vector<16x128xf32>
      %c0_11 = arith.constant 0 : index
      %c0_12 = arith.constant 0 : index
      %13 = vector.load %arg7[%c0_11, %c0_12] : memref<16x128xf32, #tpu.memory_space<vmem>>, vector<16x128xf32>
      tpu.vector_store %arg7[%c0_11, %c0_12], %12 {strides = array<i32>} : memref<16x128xf32, #tpu.memory_space<vmem>>, vector<16x128xf32>,
    } else {
    }
    %c0 = arith.constant 0 : index
    %c0_1 = arith.constant 0 : index
    %3 = vector.load %arg7[%c0, %c0_1] : memref<16x128xf32, #tpu.memory_space<vmem>>, vector<16x128xf32>
    %c0_2 = arith.constant 0 : index
    %c0_3 = arith.constant 0 : index
    %4 = vector.load %arg3[%c0_2, %c0_3] : memref<16x128xf32, #tpu.memory_space<vmem>>, vector<16x128xf32>
    %c0_4 = arith.constant 0 : index
    %c0_5 = arith.constant 0 : index
    %5 = vector.load %arg4[%c0_4, %c0_5] : memref<128x128xf32, #tpu.memory_space<vmem>>, vector<128x128xf32>
    %cst = arith.constant dense<0.000000e+00> : vector<16x128xf32>
    %6 = tpu.matmul %4, %5, %cst {dimension_numbers = #tpu.dot_dimension_numbers<[1], [0], [0], [1], [0, 0, 1, 1], [], []>} : vector<16x128xf32>, vector<128x128xf32>, vector<16x128xf32> -> vector<16x128xf32>
    %7 = arith.addf %3, %6 : vector<16x128xf32>
    %c0_6 = arith.constant 0 : index
    %c0_7 = arith.constant 0 : index
    %8 = vector.load %arg7[%c0_6, %c0_7] : memref<16x128xf32, #tpu.memory_space<vmem>>, vector<16x128xf32>
    tpu.vector_store %arg7[%c0_6, %c0_7], %7 {strides = array<i32>} : memref<16x128xf32, #tpu.memory_space<vmem>>, vector<16x128xf32>,
    %c0_i32_8 = arith.constant 0 : i32
    %9 = arith.cmpi eq, %arg2, %c0_i32_8 : i32
    %10 = arith.extui %9 : i1 to i32
    %c0_i32_9 = arith.constant 0 : i32
    %11 = arith.cmpi ne, %10, %c0_i32_9 : i32
    scf.if %11 {
      %c0_10 = arith.constant 0 : index
      %c0_11 = arith.constant 0 : index
      %12 = vector.load %arg7[%c0_10, %c0_11] : memref<16x128xf32, #tpu.memory_space<vmem>>, vector<16x128xf32>
      %c0_12 = arith.constant 0 : index
      %c0_13 = arith.constant 0 : index
      %13 = vector.load %arg5[%c0_12, %c0_13] : memref<1x128xf32, #tpu.memory_space<vmem>>, vector<1x128xf32>
      %14 = vector.broadcast %13 : vector<1x128xf32> to vector<16x128xf32>
      %15 = arith.addf %12, %14 : vector<16x128xf32>
      %c0_14 = arith.constant 0 : index
      %c0_15 = arith.constant 0 : index
      %16 = vector.load %arg6[%c0_14, %c0_15] : memref<16x128xf32, #tpu.memory_space<vmem>>, vector<16x128xf32>
      tpu.vector_store %arg6[%c0_14, %c0_15], %15 {strides = array<i32>} : memref<16x128xf32, #tpu.memory_space<vmem>>, vector<16x128xf32>,
    } else {
    }
    return
  }
  func.func @transform_0(%arg0: i32, %arg1: i32, %arg2: i32) -> (i32, i32) {
    %c0_i32 = arith.constant 0 : i32
    return %arg0, %arg2 : i32, i32
  }
  func.func @transform_1(%arg0: i32, %arg1: i32, %arg2: i32) -> (i32, i32) {
    %c0_i32 = arith.constant 0 : i32
    return %arg2, %arg1 : i32, i32
  }
  func.func @transform_2(%arg0: i32, %arg1: i32, %arg2: i32) -> (i32, i32) {
    %c0_i32 = arith.constant 0 : i32
    %c0_i32_0 = arith.constant 0 : i32
    return %c0_i32, %arg1 : i32, i32
  }
  func.func @transform_3(%arg0: i32, %arg1: i32, %arg2: i32) -> (i32, i32) {
    %c0_i32 = arith.constant 0 : i32
    return %arg0, %arg1 : i32, i32
  }
}

</mosaic_0001>

<llo_original>
// kernel: tpu_custom_call.1
$region0: #{tpu_custom_call.1}
  #allocation0 [shape = 'u32[]', space=smem, size = 0x4, offset = 0x4, fixed_abs, tag = 'smem constant byte address 0x4 - core index']
  #allocation1 [shape = 'u32[144,128]{1,0:T(1,128)}', space=vmem, size = 0x12000, scoped, tag = 'internal scratch']
  #allocation2 [shape = 'f32[16,128]{1,0:T(8,128)}', space=vmem, size = 0x2000, scoped, tag = 'scratch operand']
  %s0 = inlined_call_operand.hbm [shape: f32[16,128], index: 0, kind: input, shape index: {}]
  %s1 = inlined_call_operand.hbm [shape: f32[128,128], index: 1, kind: input, shape index: {}]
  %s2 = inlined_call_operand.hbm [shape: f32[1,128], index: 2, kind: input, shape index: {}]
  %s3 = inlined_call_operand.hbm [shape: f32[16,128], index: 3, kind: output, shape index: {}]
  %s4 = sld [smem:[#allocation0]]
  $region42: #{tpu_custom_call.1} parent=0
    _
  %s6 = ssub.s32 1, %s4
  %s7 = scalar_select 0, %s6, %s4
  $region1: #{tpu_custom_call.1} parent=0
    #allocation3 [shape = 'u8[8192]{0}', space=vmem, size = 0x2000, scoped, tag = 'input window, operand 0, single buffered']
    #allocation4 [shape = 's32[1]{0}', space=sflag, size = 0x4, scoped, tag = 'scoped memory for tpu_custom_call.1']
    #allocation5 [shape = 's32[1]{0}', space=sflag, size = 0x4, scoped, tag = 'scoped memory for tpu_custom_call.1']
    #allocation6 [shape = 'u8[65536]{0}', space=vmem, size = 0x10000, scoped, tag = 'input window, operand 1, single buffered']
    #allocation7 [shape = 's32[1]{0}', space=sflag, size = 0x4, scoped, tag = 'scoped memory for tpu_custom_call.1']
    #allocation8 [shape = 'u8[512]{0}', space=vmem, size = 0x400, scoped, tag = 'input window, operand 2, single buffered']
    #allocation9 [shape = 'u8[8192]{0}', space=vmem, size = 0x2000, scoped, tag = 'output window, operand 0, single buffered']
    %8 = vsyncpa [#allocation4], 0
    %9 = vsyncpa [#allocation7], 0
    %10 = vsyncpa [#allocation5], 0
    // Predicated region
    $region2: #{tpu_custom_call.1} parent=1 // pred_check
      _
    $region3: #{tpu_custom_call.1} parent=1 // pred_check_branch
      %12 = sbr.rel (0) target = $region5
    $region4: #{tpu_custom_call.1} parent=1 // pred_region
      %s14 = ssub.s32 256, 256
      %15 = vsyncadd [#allocation4], %s14
      %s16 = sshll.u32 [#allocation3], 4
      %s17 = int_to_ptr.vmem [resolvable:$true] %s16
      %22 = dma.hbm_to_vmem [thread:$0]  %s0, 256, %s17, [#allocation4], 128, 128, 8
    $region5: #{tpu_custom_call.1} parent=1 // pred_fallthru
      _
    // Predicated region
    $region6: #{tpu_custom_call.1} parent=1 // pred_check
      _
    $region7: #{tpu_custom_call.1} parent=1 // pred_check_branch
      %24 = sbr.rel (0) target = $region9
    $region8: #{tpu_custom_call.1} parent=1 // pred_region
      %s26 = ssub.s32 2048, 2048
      %27 = vsyncadd [#allocation7], %s26
      %s28 = sshll.u32 [#allocation6], 4
      %s29 = int_to_ptr.vmem [resolvable:$true] %s28
      %34 = dma.hbm_to_vmem [thread:$0]  %s1, 2048, %s29, [#allocation7], 128, 128, 8
    $region9: #{tpu_custom_call.1} parent=1 // pred_fallthru
      _
    // Predicated region
    $region10: #{tpu_custom_call.1} parent=1 // pred_check
      _
    $region11: #{tpu_custom_call.1} parent=1 // pred_check_branch
      %36 = sbr.rel (0) target = $region13
    $region12: #{tpu_custom_call.1} parent=1 // pred_region
      %s38 = ssub.s32 16, 16
      %39 = vsyncadd [#allocation7], %s38
      %s41 = sshll.u32 [#allocation8], 4
      %s42 = int_to_ptr.vmem [resolvable:$true] %s41
      %44 = dma.hbm_to_vmem [thread:$0]  %s2, 16, %s42, [#allocation7]
    $region13: #{tpu_custom_call.1} parent=1 // pred_fallthru
      _
    // Predicated region
    $region14: #{tpu_custom_call.1} parent=1 // pred_check
      _
    $region15: #{tpu_custom_call.1} parent=1 // pred_check_branch
      %46 = sbr.rel (0) target = $region17
    $region16: #{tpu_custom_call.1} parent=1 // pred_region
      %47 = dma.done [#allocation4], 256
    $region17: #{tpu_custom_call.1} parent=1 // pred_fallthru
      _
    // Predicated region
    $region18: #{tpu_custom_call.1} parent=1 // pred_check
      _
    $region19: #{tpu_custom_call.1} parent=1 // pred_check_branch
      %49 = sbr.rel (0) target = $region21
    $region20: #{tpu_custom_call.1} parent=1 // pred_region
      %50 = dma.done [#allocation7], 2048
    $region21: #{tpu_custom_call.1} parent=1 // pred_fallthru
      _
    // Predicated region
    $region22: #{tpu_custom_call.1} parent=1 // pred_check
      _
    $region23: #{tpu_custom_call.1} parent=1 // pred_check_branch
      %52 = sbr.rel (0) target = $region25
    $region24: #{tpu_custom_call.1} parent=1 // pred_region
      %53 = dma.done [#allocation7], 16
    $region25: #{tpu_custom_call.1} parent=1 // pred_fallthru
      _
    %p54 = scmp.eq.s32.totalorder 0, 0
    // Predicated region
    $region26: #{tpu_custom_call.1} parent=1 // pred_check
      %p55 = pneg %p54
    $region27: #{tpu_custom_call.1} parent=1 // pred_check_branch
      %57 = sbr.rel (%p55) target = $region29
    $region28: #{tpu_custom_call.1} parent=1 // pred_region
      %58 = vst [vmem:[#allocation2] sm:$0xff] 0.0
      %59 = vst [vmem:[#allocation2 + $0x8] sm:$0xff] 0.0
    $region29: #{tpu_custom_call.1} parent=1 // pred_fallthru
      _
    %v60 = vld [vmem:[#allocation2] sm:$0xff]
    %v61 = vld [vmem:[#allocation2 + $0x8] sm:$0xff]
    %v62 = vld [vmem:[#allocation3] sm:$0xff]
    %v63 = vld [vmem:[#allocation3 + $0x8] sm:$0xff]
    %v64 = vld [vmem:[#allocation6] sm:$0xff]
    %v65 = vld [vmem:[#allocation6 + $0x8] sm:$0xff]
    %v66 = vld [vmem:[#allocation6 + $0x10] sm:$0xff]
    %v67 = vld [vmem:[#allocation6 + $0x18] sm:$0xff]
    %v68 = vld [vmem:[#allocation6 + $0x20] sm:$0xff]
    %v69 = vld [vmem:[#allocation6 + $0x28] sm:$0xff]
    %v70 = vld [vmem:[#allocation6 + $0x30] sm:$0xff]
    %v71 = vld [vmem:[#allocation6 + $0x38] sm:$0xff]
    %v72 = vld [vmem:[#allocation6 + $0x40] sm:$0xff]
    %v73 = vld [vmem:[#allocation6 + $0x48] sm:$0xff]
    %v74 = vld [vmem:[#allocation6 + $0x50] sm:$0xff]
    %v75 = vld [vmem:[#allocation6 + $0x58] sm:$0xff]
    %v76 = vld [vmem:[#allocation6 + $0x60] sm:$0xff]
    %v77 = vld [vmem:[#allocation6 + $0x68] sm:$0xff]
    %v78 = vld [vmem:[#allocation6 + $0x70] sm:$0xff]
    %v79 = vld [vmem:[#allocation6 + $0x78] sm:$0xff]
    %80 = vmatprep.subr.mxu0 0.0
    %81 = vmatpush1.msra.mxu0 %v64
    %82 = vmatprep.subr.mxu0 0.0
    %83 = vmatpush1.msra.mxu0 %v65
    %84 = vmatprep.subr.mxu0 0.0
    %85 = vmatpush1.msra.mxu0 %v66
    %86 = vmatprep.subr.mxu0 0.0
    %87 = vmatpush1.msra.mxu0 %v67
    %88 = vmatprep.subr.mxu0 0.0
    %89 = vmatpush1.msra.mxu0 %v68
    %90 = vmatprep.subr.mxu0 0.0
    %91 = vmatpush1.msra.mxu0 %v69
    %92 = vmatprep.subr.mxu0 0.0
    %93 = vmatpush1.msra.mxu0 %v70
    %94 = vmatprep.subr.mxu0 0.0
    %95 = vmatpush1.msra.mxu0 %v71
    %96 = vmatprep.subr.mxu0 0.0
    %97 = vmatpush1.msra.mxu0 %v72
    %98 = vmatprep.subr.mxu0 0.0
    %99 = vmatpush1.msra.mxu0 %v73
    %100 = vmatprep.subr.mxu0 0.0
    %101 = vmatpush1.msra.mxu0 %v74
    %102 = vmatprep.subr.mxu0 0.0
    %103 = vmatpush1.msra.mxu0 %v75
    %104 = vmatprep.subr.mxu0 0.0
    %105 = vmatpush1.msra.mxu0 %v76
    %106 = vmatprep.subr.mxu0 0.0
    %107 = vmatpush1.msra.mxu0 %v77
    %108 = vmatprep.subr.mxu0 0.0
    %109 = vmatpush1.msra.mxu0 %v78
    %110 = vmatprep.subr.mxu0 0.0
    %111 = vmatpush1.msra.mxu0 %v79
    %112 = vmatprep.subr.mxu0 0.0
    %113 = vmatpush1.msra.mxu0 0.0
    %114 = vmatprep.subr.mxu0 0.0
    %115 = vmatpush1.msra.mxu0 0.0
    %116 = vmatprep.subr.mxu0 0.0
    %117 = vmatpush1.msra.mxu0 0.0
    %118 = vmatprep.subr.mxu0 0.0
    %119 = vmatpush1.msra.mxu0 0.0
    %120 = vmatprep.subr.mxu0 0.0
    %121 = vmatpush1.msra.mxu0 0.0
    %122 = vmatprep.subr.mxu0 0.0
    %123 = vmatpush1.msra.mxu0 0.0
    %124 = vmatprep.subr.mxu0 0.0
    %125 = vmatpush1.msra.mxu0 0.0
    %126 = vmatprep.subr.mxu0 0.0
    %127 = vmatpush1.msra.mxu0 0.0
    %128 = vmatprep.subr.mxu0 0.0
    %129 = vmatpush1.msra.mxu0 0.0
    %130 = vmatprep.subr.mxu0 0.0
    %131 = vmatpush1.msra.mxu0 0.0
    %132 = vmatprep.subr.mxu0 0.0
    %133 = vmatpush1.msra.mxu0 0.0
    %134 = vmatprep.subr.mxu0 0.0
    %135 = vmatpush1.msra.mxu0 0.0
    %136 = vmatprep.subr.mxu0 0.0
    %137 = vmatpush1.msra.mxu0 0.0
    %138 = vmatprep.subr.mxu0 0.0
    %139 = vmatpush1.msra.mxu0 0.0
    %140 = vmatprep.subr.mxu0 0.0
    %141 = vmatpush1.msra.mxu0 0.0
    %142 = vmatprep.subr.mxu0 0.0
    %143 = vmatpush1.msra.mxu0 0.0
    %144 = vmatprep.mubr.f32.mxu0 0.0
    %145 = vmatmul.mubr.f32.gmra.mrb[0].mxu0 %v62
    %v146 = vpop.f32.mrb[0].mxu0
    %v147 = vadd.f32 0.0, %v146
    %v148 = vpop.f32.mrb[0].mxu0
    %149 = vmatprep.mubr.f32.mxu0 0.0
    %150 = vmatmul.mubr.f32.gmra.mrb[0].mxu0 %v63
    %v151 = vpop.f32.mrb[0].mxu0
    %v152 = vadd.f32 0.0, %v151
    %v153 = vpop.f32.mrb[0].mxu0
    %154 = vdwg.mxu0
    %v155 = vadd.f32 %v60, %v147
    %v156 = vadd.f32 %v61, %v152
    %157 = vst [vmem:[#allocation2] sm:$0xff] %v155
    %158 = vst [vmem:[#allocation2 + $0x8] sm:$0xff] %v156
    // Predicated region
    $region30: #{tpu_custom_call.1} parent=1 // pred_check
      %p159 = pneg %p54
    $region31: #{tpu_custom_call.1} parent=1 // pred_check_branch
      %161 = sbr.rel (%p159) target = $region33
    $region32: #{tpu_custom_call.1} parent=1 // pred_region
      %v162 = vld [vmem:[#allocation2] sm:$0xff]
      %v163 = vld [vmem:[#allocation2 + $0x8] sm:$0xff]
      %v164 = vld [vmem:[#allocation8] sm:$0x1]
      %v166 = vlaneseq
      %v167 = vshrl.u32 %v166, 7
      %v168 = vsub.s32 0, %v167
      %v169 = vrot.slane %v164, %v168
      %v171 = vadd.f32 %v162, %v169
      %v172 = vadd.f32 %v163, %v169
      %173 = vst [vmem:[#allocation9] sm:$0xff] %v171
      %174 = vst [vmem:[#allocation9 + $0x8] sm:$0xff] %v172
    $region33: #{tpu_custom_call.1} parent=1 // pred_fallthru
      _
    // Predicated region
    $region34: #{tpu_custom_call.1} parent=1 // pred_check
      _
    $region35: #{tpu_custom_call.1} parent=1 // pred_check_branch
      %176 = sbr.rel (0) target = $region37
    $region36: #{tpu_custom_call.1} parent=1 // pred_region
      %s178 = ssub.s32 256, 256
      %179 = vsyncadd [#allocation5], %s178
      %s180 = sshll.u32 [#allocation9], 4
      %s181 = int_to_ptr.vmem [resolvable:$true] %s180
      %186 = dma.vmem_to_hbm [thread:$0]  %s181, 256, %s3, [#allocation5], 128, 128, 8
    $region37: #{tpu_custom_call.1} parent=1 // pred_fallthru
      _
    // Predicated region
    $region38: #{tpu_custom_call.1} parent=1 // pred_check
      _
    $region39: #{tpu_custom_call.1} parent=1 // pred_check_branch
      %188 = sbr.rel (0) target = $region41
    $region40: #{tpu_custom_call.1} parent=1 // pred_region
      %189 = dma.done [#allocation5], 256
    $region41: #{tpu_custom_call.1} parent=1 // pred_fallthru
      _
    %190 = vsyncpa [#allocation4], 1
    %191 = vsyncpa [#allocation7], 1
    %192 = vsyncpa [#allocation5], 1

</llo_original>
